<compile_context>
chip_gen: v5e
topology: v5e:2x2
jax: 0.10.0
libtpu: 0.0.40
codegen_flags: <defaults>
</compile_context>

<pallas_src>
import math

import jax
import jax.numpy as jnp
from jax import lax
from jax.experimental import pallas as pl
from jax.experimental.pallas import tpu as pltpu

_LANES = 128
_CHUNK_LANES = 1024                      # lanes folded per inner-loop step (8 vregs/operand)
_TARGET_BLOCK_BYTES = 4 * 1024 * 1024    # per-input, per-grid-step DMA size


def _make_kernel(n_valid, block_n, chunk, bb, tiles_per_split):
    """Builds the per-batch partial-sum kernel for fixed static sizes."""
    n_slices = chunk // _LANES
    n_chunks = block_n // chunk
    unroll = 2 if n_chunks % 2 == 0 else 1

    def kernel(pred_ref, target_ref, out_ref):
        s = pl.program_id(1)                    # reduction-axis split (parallel)
        k = pl.program_id(2)                    # tile within the split (arbitrary)
        kg = s * tiles_per_split + k            # global tile index along N
        col0 = kg * block_n                     # first global lane-column of this tile

        @pl.when(k == 0)
        def _init():
            out_ref[...] = jnp.zeros_like(out_ref)

        def accumulate(masked):
            def body(c, carry):
                acc_i, acc_s, acc_p = carry
                base = pl.multiple_of(c * chunk, _LANES)
                p = pred_ref[:, pl.ds(base, chunk)].astype(jnp.float32)
                t = target_ref[:, pl.ds(base, chunk)].astype(jnp.float32)
                if masked:
                    col = (col0 + base +
                           lax.broadcasted_iota(jnp.int32, (bb, chunk), 1))
                    valid = col < n_valid
                    p = jnp.where(valid, p, 0.0)
                    t = jnp.where(valid, t, 0.0)
                for j in range(n_slices):        # static, whole-vreg lane slices
                    ps = p[:, j * _LANES:(j + 1) * _LANES]
                    ts = t[:, j * _LANES:(j + 1) * _LANES]
                    acc_i = acc_i + ps * ts                          # sum(p*t)
                    acc_s = acc_s + (ps + ts)                        # sum(p)+sum(t)
                    acc_p = acc_p + (ps > 0).astype(jnp.float32)     # count(p>0)
                # NOTE(v7x, gated): if a bundle dump shows VALU saturated, the
                # 3 accumulate-adds can be folded on the MXU via a ones-matmul.
                return acc_i, acc_s, acc_p

            zero = jnp.zeros((bb, _LANES), jnp.float32)
            acc_i, acc_s, acc_p = lax.fori_loop(
                0, n_chunks, body, (zero, zero, zero), unroll=unroll)
            # Accumulate into the resident output block (index constant over k).
            out_ref[0, 0, 0] += acc_i
            out_ref[0, 0, 1] += acc_s
            out_ref[0, 0, 2] += acc_p

        # A tile needs masking iff it reaches past the last valid column
        # (covers both the ragged tail and fully-overrun split tiles).
        is_tail = col0 + block_n > n_valid

        @pl.when(jnp.logical_not(is_tail))
        def _fast():
            accumulate(masked=False)

        @pl.when(is_tail)
        def _tail():
            accumulate(masked=True)

    return kernel


def soft_iou_l1_norm_loss(pred, target, *, lambda_iou=0.8, lambda_l1=0.2,
                          target_block_bytes=_TARGET_BLOCK_BYTES):
    """Pallas implementation of SoftIoUL1NromLoss.forward (returns a scalar)."""
    assert pred.shape == target.shape
    B = pred.shape[0]
    N = math.prod(pred.shape[1:])

    # Free reshapes: native dtypes stay put in HBM, no pad / no extra copy.
    pred2 = pred.reshape(B, N)
    target2 = target.reshape(B, N)

    bb = min(B, 8)                              # batch rows per sublane block
    num_bb = pl.cdiv(B, bb)

    itemsize = max(pred.dtype.itemsize, target.dtype.itemsize)
    cols = pl.cdiv(N, _LANES) * _LANES          # lane-columns covering N
    if cols >= _CHUNK_LANES:
        block_n = max(_CHUNK_LANES,
                      (target_block_bytes // (bb * itemsize) // _CHUNK_LANES)
                      * _CHUNK_LANES)
        block_n = min(block_n, pl.cdiv(cols, _CHUNK_LANES) * _CHUNK_LANES)
        chunk = _CHUNK_LANES
    else:
        block_n = cols                          # tiny-N case: single small block
        chunk = cols
    num_tiles = pl.cdiv(N, block_n)

    # Parallel split of the reduction axis when the batch-block axis alone
    # cannot feed two TensorCores (v7x megacore); harmless no-op elsewhere.
    splits = 2 if (num_bb == 1 and num_tiles >= 2) else 1
    tiles_per_split = pl.cdiv(num_tiles, splits)

    kernel = _make_kernel(N, block_n, chunk, bb, tiles_per_split)

    def in_map(i, s, k):
        # Clamp so over-run tiles of the last split re-read a valid block;
        # the kernel masks their contribution to exactly zero.
        return (i, jnp.minimum(s * tiles_per_split + k, num_tiles - 1))

    partials = pl.pallas_call(
        kernel,
        out_shape=jax.ShapeDtypeStruct((num_bb, splits, 3, bb, _LANES),
                                       jnp.float32),
        grid_spec=pltpu.PrefetchScalarGridSpec(
            num_scalar_prefetch=0,
            grid=(num_bb, splits, tiles_per_split),
            in_specs=[
                # (optional: pipeline_mode=pl.Buffered(3) if xprof shows exposed DMA)
                pl.BlockSpec((bb, block_n), in_map),
                pl.BlockSpec((bb, block_n), in_map),
            ],
            out_specs=pl.BlockSpec((1, 1, 3, bb, _LANES),
                                   lambda i, s, k: (i, s, 0, 0, 0)),
        ),
        compiler_params=pltpu.CompilerParams(
            dimension_semantics=("parallel", "parallel", "arbitrary"),
            vmem_limit_bytes=32 * 1024 * 1024,
        ),
    )(pred2, target2)

    # Tiny final combine in the wrapper (lane-dense partials -> scalar loss).
    stats = jnp.sum(partials, axis=(1, 4))                           # (num_bb, 3, bb)
    stats = jnp.moveaxis(stats, 1, 2).reshape(num_bb * bb, 3)[:B]    # (B, 3)
    inter = stats[:, 0]
    psum_tsum = stats[:, 1]
    pos = jnp.sum(stats[:, 2])

    smooth = jnp.float32(1.0)
    iou = (inter + smooth) / (psum_tsum - inter + smooth)
    iouloss = jnp.float32(1.0) - jnp.mean(iou)
    l1loss = pos / jnp.float32(B * N)
    return jnp.float32(lambda_iou) * iouloss + jnp.float32(lambda_l1) * l1loss


def _reference(pred, target, lambda_iou=0.8, lambda_l1=0.2):
    pred = pred.astype(jnp.float32)
    target = target.astype(jnp.float32)
    smooth = 1.0
    inter = jnp.sum(pred * target, axis=(1, 2, 3))
    psum = jnp.sum(pred, axis=(1, 2, 3))
    tsum = jnp.sum(target, axis=(1, 2, 3))
    iou = (inter + smooth) / (psum + tsum - inter + smooth)
    iouloss = 1.0 - jnp.mean(iou)
    l1loss = jnp.sum((pred > 0).astype(jnp.float32)) / pred.size
    return lambda_iou * iouloss + lambda_l1 * l1loss


if __name__ == "__main__":
    key = jax.random.PRNGKey(0)
    k1, k2 = jax.random.split(key)

    def check(shape, **kw):
        # pred: mixed-sign logits-like values (so pred > 0 is non-trivial);
        # target: binary mask.
        pred = jax.random.normal(k1, shape, dtype=jnp.float32)
        target = (jax.random.uniform(k2, shape) > 0.5).astype(jnp.float32)
        loss = jax.block_until_ready(soft_iou_l1_norm_loss(pred, target, **kw))
        ref = _reference(pred, target)
        assert jnp.allclose(loss, ref, atol=1e-5, rtol=1e-4), (shape, loss, ref)

    # Lane-aligned N (= 1024): pure zero-copy path, single tile, no masking.
    check((2, 4, 16, 16))
    # Ragged N (= 969, not a multiple of 128): in-kernel tail lane-masking.
    check((2, 3, 17, 19))
    # Multiple tiles + reduction-axis split (blocks forced small to exercise it).
    check((2, 1, 40, 40), target_block_bytes=8192)   # N=1600 -> 2 tiles, 2 splits
    # Odd tile count with a split: the over-run tile is masked to exactly zero.
    check((2, 1, 52, 50), target_block_bytes=8192)   # N=2600 -> 3 tiles, 2 splits

    print("KERNEL_OK")
</pallas_src>

<mosaic_0001>
module attributes {stable_mosaic.version = 11 : i64} {
  func.func @kernel(%arg0: i32, %arg1: i32, %arg2: i32, %arg3: memref<2x1024xf32, #tpu.memory_space<vmem>>, %arg4: memref<2x1024xf32, #tpu.memory_space<vmem>>, %arg5: memref<1x1x3x2x128xf32, #tpu.memory_space<vmem>>) attributes {dimension_semantics = [#tpu.dimension_semantics<parallel>, #tpu.dimension_semantics<parallel>, #tpu.dimension_semantics<arbitrary>], iteration_bounds = array<i64: 1, 1, 1>, scalar_prefetch = 0 : i64, scratch_operands = 0 : i64, tpu.core_type = #tpu.core_type<tc>, window_params = [{transform_indices = @transform_0, window_bounds = array<i64: 2, 1024>}, {transform_indices = @transform_1, window_bounds = array<i64: 2, 1024>}, {transform_indices = @transform_2, window_bounds = array<i64: 1, 1, 3, 2, 128>}]} {
    %c1_i32 = arith.constant 1 : i32
    %0 = arith.muli %arg1, %c1_i32 : i32
    %1 = arith.addi %0, %arg2 : i32
    %c1024_i32 = arith.constant 1024 : i32
    %2 = arith.muli %1, %c1024_i32 : i32
    %c0_i32 = arith.constant 0 : i32
    %3 = arith.cmpi eq, %arg2, %c0_i32 : i32
    %4 = arith.extui %3 : i1 to i32
    %c0_i32_0 = arith.constant 0 : i32
    %5 = arith.cmpi ne, %4, %c0_i32_0 : i32
    scf.if %5 {
      %cst = arith.constant 0.000000e+00 : f32
      %13 = vector.broadcast %cst : f32 to vector<1x1x3x2x128xf32>
      %c0 = arith.constant 0 : index
      %c0_5 = arith.constant 0 : index
      %c0_6 = arith.constant 0 : index
      %c0_7 = arith.constant 0 : index
      %c0_8 = arith.constant 0 : index
      %14 = vector.load %arg5[%c0, %c0_5, %c0_6, %c0_7, %c0_8] : memref<1x1x3x2x128xf32, #tpu.memory_space<vmem>>, vector<1x1x3x2x128xf32>
      tpu.vector_store %arg5[%c0, %c0_5, %c0_6, %c0_7, %c0_8], %13 {strides = array<i32>} : memref<1x1x3x2x128xf32, #tpu.memory_space<vmem>>, vector<1x1x3x2x128xf32>,
    } else {
    }
    %c1024_i32_1 = arith.constant 1024 : i32
    %6 = arith.addi %2, %c1024_i32_1 : i32
    %c1024_i32_2 = arith.constant 1024 : i32
    %7 = arith.cmpi sgt, %6, %c1024_i32_2 : i32
    %true = arith.constant true
    %8 = arith.xori %7, %true : i1
    %9 = arith.extui %8 : i1 to i32
    %c0_i32_3 = arith.constant 0 : i32
    %10 = arith.cmpi ne, %9, %c0_i32_3 : i32
    scf.if %10 {
      %cst = arith.constant 0.000000e+00 : f32
      %13 = vector.broadcast %cst : f32 to vector<2x128xf32>
      %c0_i32_5 = arith.constant 0 : i32
      %c1024_i32_6 = arith.constant 1024 : i32
      %14 = arith.muli %c0_i32_5, %c1024_i32_6 : i32
      %15 = tpu.assume_multiple %14, 128 : i32
      %c0 = arith.constant 0 : index
      %16 = arith.index_cast %15 : i32 to index
      %17 = vector.load %arg3[%c0, %16] : memref<2x1024xf32, #tpu.memory_space<vmem>>, vector<2x1024xf32>
      %c0_7 = arith.constant 0 : index
      %18 = arith.index_cast %15 : i32 to index
      %19 = vector.load %arg4[%c0_7, %18] : memref<2x1024xf32, #tpu.memory_space<vmem>>, vector<2x1024xf32>
      %20 = vector.extract_strided_slice %17 {offsets = [0, 0], sizes = [2, 128], strides = [1, 1]} : vector<2x1024xf32> to vector<2x128xf32>
      %21 = vector.extract_strided_slice %19 {offsets = [0, 0], sizes = [2, 128], strides = [1, 1]} : vector<2x1024xf32> to vector<2x128xf32>
      %22 = arith.mulf %20, %21 : vector<2x128xf32>
      %23 = arith.addf %13, %22 : vector<2x128xf32>
      %24 = arith.addf %20, %21 : vector<2x128xf32>
      %25 = arith.addf %13, %24 : vector<2x128xf32>
      %cst_8 = arith.constant 0.000000e+00 : f32
      %26 = vector.broadcast %cst_8 : f32 to vector<2x128xf32>
      %27 = arith.cmpf ogt, %20, %26 : vector<2x128xf32>
      %28 = arith.extui %27 : vector<2x128xi1> to vector<2x128xi32>
      %29 = arith.sitofp %28 : vector<2x128xi32> to vector<2x128xf32>
      %30 = arith.addf %13, %29 : vector<2x128xf32>
      %31 = vector.extract_strided_slice %17 {offsets = [0, 128], sizes = [2, 128], strides = [1, 1]} : vector<2x1024xf32> to vector<2x128xf32>
      %32 = vector.extract_strided_slice %19 {offsets = [0, 128], sizes = [2, 128], strides = [1, 1]} : vector<2x1024xf32> to vector<2x128xf32>
      %33 = arith.mulf %31, %32 : vector<2x128xf32>
      %34 = arith.addf %23, %33 : vector<2x128xf32>
      %35 = arith.addf %31, %32 : vector<2x128xf32>
      %36 = arith.addf %25, %35 : vector<2x128xf32>
      %cst_9 = arith.constant 0.000000e+00 : f32
      %37 = vector.broadcast %cst_9 : f32 to vector<2x128xf32>
      %38 = arith.cmpf ogt, %31, %37 : vector<2x128xf32>
      %39 = arith.extui %38 : vector<2x128xi1> to vector<2x128xi32>
      %40 = arith.sitofp %39 : vector<2x128xi32> to vector<2x128xf32>
      %41 = arith.addf %30, %40 : vector<2x128xf32>
      %42 = vector.extract_strided_slice %17 {offsets = [0, 256], sizes = [2, 128], strides = [1, 1]} : vector<2x1024xf32> to vector<2x128xf32>
      %43 = vector.extract_strided_slice %19 {offsets = [0, 256], sizes = [2, 128], strides = [1, 1]} : vector<2x1024xf32> to vector<2x128xf32>
      %44 = arith.mulf %42, %43 : vector<2x128xf32>
      %45 = arith.addf %34, %44 : vector<2x128xf32>
      %46 = arith.addf %42, %43 : vector<2x128xf32>
      %47 = arith.addf %36, %46 : vector<2x128xf32>
      %cst_10 = arith.constant 0.000000e+00 : f32
      %48 = vector.broadcast %cst_10 : f32 to vector<2x128xf32>
      %49 = arith.cmpf ogt, %42, %48 : vector<2x128xf32>
      %50 = arith.extui %49 : vector<2x128xi1> to vector<2x128xi32>
      %51 = arith.sitofp %50 : vector<2x128xi32> to vector<2x128xf32>
      %52 = arith.addf %41, %51 : vector<2x128xf32>
      %53 = vector.extract_strided_slice %17 {offsets = [0, 384], sizes = [2, 128], strides = [1, 1]} : vector<2x1024xf32> to vector<2x128xf32>
      %54 = vector.extract_strided_slice %19 {offsets = [0, 384], sizes = [2, 128], strides = [1, 1]} : vector<2x1024xf32> to vector<2x128xf32>
      %55 = arith.mulf %53, %54 : vector<2x128xf32>
      %56 = arith.addf %45, %55 : vector<2x128xf32>
      %57 = arith.addf %53, %54 : vector<2x128xf32>
      %58 = arith.addf %47, %57 : vector<2x128xf32>
      %cst_11 = arith.constant 0.000000e+00 : f32
      %59 = vector.broadcast %cst_11 : f32 to vector<2x128xf32>
      %60 = arith.cmpf ogt, %53, %59 : vector<2x128xf32>
      %61 = arith.extui %60 : vector<2x128xi1> to vector<2x128xi32>
      %62 = arith.sitofp %61 : vector<2x128xi32> to vector<2x128xf32>
      %63 = arith.addf %52, %62 : vector<2x128xf32>
      %64 = vector.extract_strided_slice %17 {offsets = [0, 512], sizes = [2, 128], strides = [1, 1]} : vector<2x1024xf32> to vector<2x128xf32>
      %65 = vector.extract_strided_slice %19 {offsets = [0, 512], sizes = [2, 128], strides = [1, 1]} : vector<2x1024xf32> to vector<2x128xf32>
      %66 = arith.mulf %64, %65 : vector<2x128xf32>
      %67 = arith.addf %56, %66 : vector<2x128xf32>
      %68 = arith.addf %64, %65 : vector<2x128xf32>
      %69 = arith.addf %58, %68 : vector<2x128xf32>
      %cst_12 = arith.constant 0.000000e+00 : f32
      %70 = vector.broadcast %cst_12 : f32 to vector<2x128xf32>
      %71 = arith.cmpf ogt, %64, %70 : vector<2x128xf32>
      %72 = arith.extui %71 : vector<2x128xi1> to vector<2x128xi32>
      %73 = arith.sitofp %72 : vector<2x128xi32> to vector<2x128xf32>
      %74 = arith.addf %63, %73 : vector<2x128xf32>
      %75 = vector.extract_strided_slice %17 {offsets = [0, 640], sizes = [2, 128], strides = [1, 1]} : vector<2x1024xf32> to vector<2x128xf32>
      %76 = vector.extract_strided_slice %19 {offsets = [0, 640], sizes = [2, 128], strides = [1, 1]} : vector<2x1024xf32> to vector<2x128xf32>
      %77 = arith.mulf %75, %76 : vector<2x128xf32>
      %78 = arith.addf %67, %77 : vector<2x128xf32>
      %79 = arith.addf %75, %76 : vector<2x128xf32>
      %80 = arith.addf %69, %79 : vector<2x128xf32>
      %cst_13 = arith.constant 0.000000e+00 : f32
      %81 = vector.broadcast %cst_13 : f32 to vector<2x128xf32>
      %82 = arith.cmpf ogt, %75, %81 : vector<2x128xf32>
      %83 = arith.extui %82 : vector<2x128xi1> to vector<2x128xi32>
      %84 = arith.sitofp %83 : vector<2x128xi32> to vector<2x128xf32>
      %85 = arith.addf %74, %84 : vector<2x128xf32>
      %86 = vector.extract_strided_slice %17 {offsets = [0, 768], sizes = [2, 128], strides = [1, 1]} : vector<2x1024xf32> to vector<2x128xf32>
      %87 = vector.extract_strided_slice %19 {offsets = [0, 768], sizes = [2, 128], strides = [1, 1]} : vector<2x1024xf32> to vector<2x128xf32>
      %88 = arith.mulf %86, %87 : vector<2x128xf32>
      %89 = arith.addf %78, %88 : vector<2x128xf32>
      %90 = arith.addf %86, %87 : vector<2x128xf32>
      %91 = arith.addf %80, %90 : vector<2x128xf32>
      %cst_14 = arith.constant 0.000000e+00 : f32
      %92 = vector.broadcast %cst_14 : f32 to vector<2x128xf32>
      %93 = arith.cmpf ogt, %86, %92 : vector<2x128xf32>
      %94 = arith.extui %93 : vector<2x128xi1> to vector<2x128xi32>
      %95 = arith.sitofp %94 : vector<2x128xi32> to vector<2x128xf32>
      %96 = arith.addf %85, %95 : vector<2x128xf32>
      %97 = vector.extract_strided_slice %17 {offsets = [0, 896], sizes = [2, 128], strides = [1, 1]} : vector<2x1024xf32> to vector<2x128xf32>
      %98 = vector.extract_strided_slice %19 {offsets = [0, 896], sizes = [2, 128], strides = [1, 1]} : vector<2x1024xf32> to vector<2x128xf32>
      %99 = arith.mulf %97, %98 : vector<2x128xf32>
      %100 = arith.addf %89, %99 : vector<2x128xf32>
      %101 = arith.addf %97, %98 : vector<2x128xf32>
      %102 = arith.addf %91, %101 : vector<2x128xf32>
      %cst_15 = arith.constant 0.000000e+00 : f32
      %103 = vector.broadcast %cst_15 : f32 to vector<2x128xf32>
      %104 = arith.cmpf ogt, %97, %103 : vector<2x128xf32>
      %105 = arith.extui %104 : vector<2x128xi1> to vector<2x128xi32>
      %106 = arith.sitofp %105 : vector<2x128xi32> to vector<2x128xf32>
      %107 = arith.addf %96, %106 : vector<2x128xf32>
      %c1_i32_16 = arith.constant 1 : i32
      %c0_17 = arith.constant 0 : index
      %c0_18 = arith.constant 0 : index
      %c0_19 = arith.constant 0 : index
      %c0_20 = arith.constant 0 : index
      %c0_21 = arith.constant 0 : index
      %108 = vector.load %arg5[%c0_17, %c0_18, %c0_19, %c0_20, %c0_21] : memref<1x1x3x2x128xf32, #tpu.memory_space<vmem>>, vector<1x1x1x2x128xf32>
      %109 = vector.shape_cast %108 : vector<1x1x1x2x128xf32> to vector<2x128xf32>
      %110 = arith.addf %109, %100 : vector<2x128xf32>
      %c0_22 = arith.constant 0 : index
      %c0_23 = arith.constant 0 : index
      %c0_24 = arith.constant 0 : index
      %c0_25 = arith.constant 0 : index
      %c0_26 = arith.constant 0 : index
      %111 = vector.load %arg5[%c0_22, %c0_23, %c0_24, %c0_25, %c0_26] : memref<1x1x3x2x128xf32, #tpu.memory_space<vmem>>, vector<1x1x1x2x128xf32>
      %112 = vector.shape_cast %111 : vector<1x1x1x2x128xf32> to vector<2x128xf32>
      %113 = vector.shape_cast %110 : vector<2x128xf32> to vector<1x1x1x2x128xf32>
      tpu.vector_store %arg5[%c0_22, %c0_23, %c0_24, %c0_25, %c0_26], %113 {strides = array<i32>} : memref<1x1x3x2x128xf32, #tpu.memory_space<vmem>>, vector<1x1x1x2x128xf32>,
      %c0_27 = arith.constant 0 : index
      %c0_28 = arith.constant 0 : index
      %c1 = arith.constant 1 : index
      %c0_29 = arith.constant 0 : index
      %c0_30 = arith.constant 0 : index
      %114 = vector.load %arg5[%c0_27, %c0_28, %c1, %c0_29, %c0_30] : memref<1x1x3x2x128xf32, #tpu.memory_space<vmem>>, vector<1x1x1x2x128xf32>
      %115 = vector.shape_cast %114 : vector<1x1x1x2x128xf32> to vector<2x128xf32>
      %116 = arith.addf %115, %102 : vector<2x128xf32>
      %c0_31 = arith.constant 0 : index
      %c0_32 = arith.constant 0 : index
      %c1_33 = arith.constant 1 : index
      %c0_34 = arith.constant 0 : index
      %c0_35 = arith.constant 0 : index
      %117 = vector.load %arg5[%c0_31, %c0_32, %c1_33, %c0_34, %c0_35] : memref<1x1x3x2x128xf32, #tpu.memory_space<vmem>>, vector<1x1x1x2x128xf32>
      %118 = vector.shape_cast %117 : vector<1x1x1x2x128xf32> to vector<2x128xf32>
      %119 = vector.shape_cast %116 : vector<2x128xf32> to vector<1x1x1x2x128xf32>
      tpu.vector_store %arg5[%c0_31, %c0_32, %c1_33, %c0_34, %c0_35], %119 {strides = array<i32>} : memref<1x1x3x2x128xf32, #tpu.memory_space<vmem>>, vector<1x1x1x2x128xf32>,
      %c0_36 = arith.constant 0 : index
      %c0_37 = arith.constant 0 : index
      %c2 = arith.constant 2 : index
      %c0_38 = arith.constant 0 : index
      %c0_39 = arith.constant 0 : index
      %120 = vector.load %arg5[%c0_36, %c0_37, %c2, %c0_38, %c0_39] : memref<1x1x3x2x128xf32, #tpu.memory_space<vmem>>, vector<1x1x1x2x128xf32>
      %121 = vector.shape_cast %120 : vector<1x1x1x2x128xf32> to vector<2x128xf32>
      %122 = arith.addf %121, %107 : vector<2x128xf32>
      %c0_40 = arith.constant 0 : index
      %c0_41 = arith.constant 0 : index
      %c2_42 = arith.constant 2 : index
      %c0_43 = arith.constant 0 : index
      %c0_44 = arith.constant 0 : index
      %123 = vector.load %arg5[%c0_40, %c0_41, %c2_42, %c0_43, %c0_44] : memref<1x1x3x2x128xf32, #tpu.memory_space<vmem>>, vector<1x1x1x2x128xf32>
      %124 = vector.shape_cast %123 : vector<1x1x1x2x128xf32> to vector<2x128xf32>
      %125 = vector.shape_cast %122 : vector<2x128xf32> to vector<1x1x1x2x128xf32>
      tpu.vector_store %arg5[%c0_40, %c0_41, %c2_42, %c0_43, %c0_44], %125 {strides = array<i32>} : memref<1x1x3x2x128xf32, #tpu.memory_space<vmem>>, vector<1x1x1x2x128xf32>,
    } else {
    }
    %11 = arith.extui %7 : i1 to i32
    %c0_i32_4 = arith.constant 0 : i32
    %12 = arith.cmpi ne, %11, %c0_i32_4 : i32
    scf.if %12 {
      %cst = arith.constant 0.000000e+00 : f32
      %13 = vector.broadcast %cst : f32 to vector<2x128xf32>
      %c0_i32_5 = arith.constant 0 : i32
      %c1024_i32_6 = arith.constant 1024 : i32
      %14 = arith.muli %c0_i32_5, %c1024_i32_6 : i32
      %15 = tpu.assume_multiple %14, 128 : i32
      %c0 = arith.constant 0 : index
      %16 = arith.index_cast %15 : i32 to index
      %17 = vector.load %arg3[%c0, %16] : memref<2x1024xf32, #tpu.memory_space<vmem>>, vector<2x1024xf32>
      %c0_7 = arith.constant 0 : index
      %18 = arith.index_cast %15 : i32 to index
      %19 = vector.load %arg4[%c0_7, %18] : memref<2x1024xf32, #tpu.memory_space<vmem>>, vector<2x1024xf32>
      %20 = arith.addi %2, %15 : i32
      %21 = tpu.iota {dimensions = array<i32: 1>} : vector<2x1024xi32>
      %22 = vector.broadcast %20 : i32 to vector<2x1024xi32>
      %23 = arith.addi %22, %21 : vector<2x1024xi32>
      %c1024_i32_8 = arith.constant 1024 : i32
      %24 = vector.broadcast %c1024_i32_8 : i32 to vector<2x1024xi32>
      %25 = arith.cmpi slt, %23, %24 : vector<2x1024xi32>
      %cst_9 = arith.constant 0.000000e+00 : f32
      %26 = vector.broadcast %cst_9 : f32 to vector<2x1024xf32>
      %27 = arith.select %25, %17, %26 : vector<2x1024xi1>, vector<2x1024xf32>
      %cst_10 = arith.constant 0.000000e+00 : f32
      %28 = vector.broadcast %cst_10 : f32 to vector<2x1024xf32>
      %29 = arith.select %25, %19, %28 : vector<2x1024xi1>, vector<2x1024xf32>
      %30 = vector.extract_strided_slice %27 {offsets = [0, 0], sizes = [2, 128], strides = [1, 1]} : vector<2x1024xf32> to vector<2x128xf32>
      %31 = vector.extract_strided_slice %29 {offsets = [0, 0], sizes = [2, 128], strides = [1, 1]} : vector<2x1024xf32> to vector<2x128xf32>
      %32 = arith.mulf %30, %31 : vector<2x128xf32>
      %33 = arith.addf %13, %32 : vector<2x128xf32>
      %34 = arith.addf %30, %31 : vector<2x128xf32>
      %35 = arith.addf %13, %34 : vector<2x128xf32>
      %cst_11 = arith.constant 0.000000e+00 : f32
      %36 = vector.broadcast %cst_11 : f32 to vector<2x128xf32>
      %37 = arith.cmpf ogt, %30, %36 : vector<2x128xf32>
      %38 = arith.extui %37 : vector<2x128xi1> to vector<2x128xi32>
      %39 = arith.sitofp %38 : vector<2x128xi32> to vector<2x128xf32>
      %40 = arith.addf %13, %39 : vector<2x128xf32>
      %41 = vector.extract_strided_slice %27 {offsets = [0, 128], sizes = [2, 128], strides = [1, 1]} : vector<2x1024xf32> to vector<2x128xf32>
      %42 = vector.extract_strided_slice %29 {offsets = [0, 128], sizes = [2, 128], strides = [1, 1]} : vector<2x1024xf32> to vector<2x128xf32>
      %43 = arith.mulf %41, %42 : vector<2x128xf32>
      %44 = arith.addf %33, %43 : vector<2x128xf32>
      %45 = arith.addf %41, %42 : vector<2x128xf32>
      %46 = arith.addf %35, %45 : vector<2x128xf32>
      %cst_12 = arith.constant 0.000000e+00 : f32
      %47 = vector.broadcast %cst_12 : f32 to vector<2x128xf32>
      %48 = arith.cmpf ogt, %41, %47 : vector<2x128xf32>
      %49 = arith.extui %48 : vector<2x128xi1> to vector<2x128xi32>
      %50 = arith.sitofp %49 : vector<2x128xi32> to vector<2x128xf32>
      %51 = arith.addf %40, %50 : vector<2x128xf32>
      %52 = vector.extract_strided_slice %27 {offsets = [0, 256], sizes = [2, 128], strides = [1, 1]} : vector<2x1024xf32> to vector<2x128xf32>
      %53 = vector.extract_strided_slice %29 {offsets = [0, 256], sizes = [2, 128], strides = [1, 1]} : vector<2x1024xf32> to vector<2x128xf32>
      %54 = arith.mulf %52, %53 : vector<2x128xf32>
      %55 = arith.addf %44, %54 : vector<2x128xf32>
      %56 = arith.addf %52, %53 : vector<2x128xf32>
      %57 = arith.addf %46, %56 : vector<2x128xf32>
      %cst_13 = arith.constant 0.000000e+00 : f32
      %58 = vector.broadcast %cst_13 : f32 to vector<2x128xf32>
      %59 = arith.cmpf ogt, %52, %58 : vector<2x128xf32>
      %60 = arith.extui %59 : vector<2x128xi1> to vector<2x128xi32>
      %61 = arith.sitofp %60 : vector<2x128xi32> to vector<2x128xf32>
      %62 = arith.addf %51, %61 : vector<2x128xf32>
      %63 = vector.extract_strided_slice %27 {offsets = [0, 384], sizes = [2, 128], strides = [1, 1]} : vector<2x1024xf32> to vector<2x128xf32>
      %64 = vector.extract_strided_slice %29 {offsets = [0, 384], sizes = [2, 128], strides = [1, 1]} : vector<2x1024xf32> to vector<2x128xf32>
      %65 = arith.mulf %63, %64 : vector<2x128xf32>
      %66 = arith.addf %55, %65 : vector<2x128xf32>
      %67 = arith.addf %63, %64 : vector<2x128xf32>
      %68 = arith.addf %57, %67 : vector<2x128xf32>
      %cst_14 = arith.constant 0.000000e+00 : f32
      %69 = vector.broadcast %cst_14 : f32 to vector<2x128xf32>
      %70 = arith.cmpf ogt, %63, %69 : vector<2x128xf32>
      %71 = arith.extui %70 : vector<2x128xi1> to vector<2x128xi32>
      %72 = arith.sitofp %71 : vector<2x128xi32> to vector<2x128xf32>
      %73 = arith.addf %62, %72 : vector<2x128xf32>
      %74 = vector.extract_strided_slice %27 {offsets = [0, 512], sizes = [2, 128], strides = [1, 1]} : vector<2x1024xf32> to vector<2x128xf32>
      %75 = vector.extract_strided_slice %29 {offsets = [0, 512], sizes = [2, 128], strides = [1, 1]} : vector<2x1024xf32> to vector<2x128xf32>
      %76 = arith.mulf %74, %75 : vector<2x128xf32>
      %77 = arith.addf %66, %76 : vector<2x128xf32>
      %78 = arith.addf %74, %75 : vector<2x128xf32>
      %79 = arith.addf %68, %78 : vector<2x128xf32>
      %cst_15 = arith.constant 0.000000e+00 : f32
      %80 = vector.broadcast %cst_15 : f32 to vector<2x128xf32>
      %81 = arith.cmpf ogt, %74, %80 : vector<2x128xf32>
      %82 = arith.extui %81 : vector<2x128xi1> to vector<2x128xi32>
      %83 = arith.sitofp %82 : vector<2x128xi32> to vector<2x128xf32>
      %84 = arith.addf %73, %83 : vector<2x128xf32>
      %85 = vector.extract_strided_slice %27 {offsets = [0, 640], sizes = [2, 128], strides = [1, 1]} : vector<2x1024xf32> to vector<2x128xf32>
      %86 = vector.extract_strided_slice %29 {offsets = [0, 640], sizes = [2, 128], strides = [1, 1]} : vector<2x1024xf32> to vector<2x128xf32>
      %87 = arith.mulf %85, %86 : vector<2x128xf32>
      %88 = arith.addf %77, %87 : vector<2x128xf32>
      %89 = arith.addf %85, %86 : vector<2x128xf32>
      %90 = arith.addf %79, %89 : vector<2x128xf32>
      %cst_16 = arith.constant 0.000000e+00 : f32
      %91 = vector.broadcast %cst_16 : f32 to vector<2x128xf32>
      %92 = arith.cmpf ogt, %85, %91 : vector<2x128xf32>
      %93 = arith.extui %92 : vector<2x128xi1> to vector<2x128xi32>
      %94 = arith.sitofp %93 : vector<2x128xi32> to vector<2x128xf32>
      %95 = arith.addf %84, %94 : vector<2x128xf32>
      %96 = vector.extract_strided_slice %27 {offsets = [0, 768], sizes = [2, 128], strides = [1, 1]} : vector<2x1024xf32> to vector<2x128xf32>
      %97 = vector.extract_strided_slice %29 {offsets = [0, 768], sizes = [2, 128], strides = [1, 1]} : vector<2x1024xf32> to vector<2x128xf32>
      %98 = arith.mulf %96, %97 : vector<2x128xf32>
      %99 = arith.addf %88, %98 : vector<2x128xf32>
      %100 = arith.addf %96, %97 : vector<2x128xf32>
      %101 = arith.addf %90, %100 : vector<2x128xf32>
      %cst_17 = arith.constant 0.000000e+00 : f32
      %102 = vector.broadcast %cst_17 : f32 to vector<2x128xf32>
      %103 = arith.cmpf ogt, %96, %102 : vector<2x128xf32>
      %104 = arith.extui %103 : vector<2x128xi1> to vector<2x128xi32>
      %105 = arith.sitofp %104 : vector<2x128xi32> to vector<2x128xf32>
      %106 = arith.addf %95, %105 : vector<2x128xf32>
      %107 = vector.extract_strided_slice %27 {offsets = [0, 896], sizes = [2, 128], strides = [1, 1]} : vector<2x1024xf32> to vector<2x128xf32>
      %108 = vector.extract_strided_slice %29 {offsets = [0, 896], sizes = [2, 128], strides = [1, 1]} : vector<2x1024xf32> to vector<2x128xf32>
      %109 = arith.mulf %107, %108 : vector<2x128xf32>
      %110 = arith.addf %99, %109 : vector<2x128xf32>
      %111 = arith.addf %107, %108 : vector<2x128xf32>
      %112 = arith.addf %101, %111 : vector<2x128xf32>
      %cst_18 = arith.constant 0.000000e+00 : f32
      %113 = vector.broadcast %cst_18 : f32 to vector<2x128xf32>
      %114 = arith.cmpf ogt, %107, %113 : vector<2x128xf32>
      %115 = arith.extui %114 : vector<2x128xi1> to vector<2x128xi32>
      %116 = arith.sitofp %115 : vector<2x128xi32> to vector<2x128xf32>
      %117 = arith.addf %106, %116 : vector<2x128xf32>
      %c1_i32_19 = arith.constant 1 : i32
      %c0_20 = arith.constant 0 : index
      %c0_21 = arith.constant 0 : index
      %c0_22 = arith.constant 0 : index
      %c0_23 = arith.constant 0 : index
      %c0_24 = arith.constant 0 : index
      %118 = vector.load %arg5[%c0_20, %c0_21, %c0_22, %c0_23, %c0_24] : memref<1x1x3x2x128xf32, #tpu.memory_space<vmem>>, vector<1x1x1x2x128xf32>
      %119 = vector.shape_cast %118 : vector<1x1x1x2x128xf32> to vector<2x128xf32>
      %120 = arith.addf %119, %110 : vector<2x128xf32>
      %c0_25 = arith.constant 0 : index
      %c0_26 = arith.constant 0 : index
      %c0_27 = arith.constant 0 : index
      %c0_28 = arith.constant 0 : index
      %c0_29 = arith.constant 0 : index
      %121 = vector.load %arg5[%c0_25, %c0_26, %c0_27, %c0_28, %c0_29] : memref<1x1x3x2x128xf32, #tpu.memory_space<vmem>>, vector<1x1x1x2x128xf32>
      %122 = vector.shape_cast %121 : vector<1x1x1x2x128xf32> to vector<2x128xf32>
      %123 = vector.shape_cast %120 : vector<2x128xf32> to vector<1x1x1x2x128xf32>
      tpu.vector_store %arg5[%c0_25, %c0_26, %c0_27, %c0_28, %c0_29], %123 {strides = array<i32>} : memref<1x1x3x2x128xf32, #tpu.memory_space<vmem>>, vector<1x1x1x2x128xf32>,
      %c0_30 = arith.constant 0 : index
      %c0_31 = arith.constant 0 : index
      %c1 = arith.constant 1 : index
      %c0_32 = arith.constant 0 : index
      %c0_33 = arith.constant 0 : index
      %124 = vector.load %arg5[%c0_30, %c0_31, %c1, %c0_32, %c0_33] : memref<1x1x3x2x128xf32, #tpu.memory_space<vmem>>, vector<1x1x1x2x128xf32>
      %125 = vector.shape_cast %124 : vector<1x1x1x2x128xf32> to vector<2x128xf32>
      %126 = arith.addf %125, %112 : vector<2x128xf32>
      %c0_34 = arith.constant 0 : index
      %c0_35 = arith.constant 0 : index
      %c1_36 = arith.constant 1 : index
      %c0_37 = arith.constant 0 : index
      %c0_38 = arith.constant 0 : index
      %127 = vector.load %arg5[%c0_34, %c0_35, %c1_36, %c0_37, %c0_38] : memref<1x1x3x2x128xf32, #tpu.memory_space<vmem>>, vector<1x1x1x2x128xf32>
      %128 = vector.shape_cast %127 : vector<1x1x1x2x128xf32> to vector<2x128xf32>
      %129 = vector.shape_cast %126 : vector<2x128xf32> to vector<1x1x1x2x128xf32>
      tpu.vector_store %arg5[%c0_34, %c0_35, %c1_36, %c0_37, %c0_38], %129 {strides = array<i32>} : memref<1x1x3x2x128xf32, #tpu.memory_space<vmem>>, vector<1x1x1x2x128xf32>,
      %c0_39 = arith.constant 0 : index
      %c0_40 = arith.constant 0 : index
      %c2 = arith.constant 2 : index
      %c0_41 = arith.constant 0 : index
      %c0_42 = arith.constant 0 : index
      %130 = vector.load %arg5[%c0_39, %c0_40, %c2, %c0_41, %c0_42] : memref<1x1x3x2x128xf32, #tpu.memory_space<vmem>>, vector<1x1x1x2x128xf32>
      %131 = vector.shape_cast %130 : vector<1x1x1x2x128xf32> to vector<2x128xf32>
      %132 = arith.addf %131, %117 : vector<2x128xf32>
      %c0_43 = arith.constant 0 : index
      %c0_44 = arith.constant 0 : index
      %c2_45 = arith.constant 2 : index
      %c0_46 = arith.constant 0 : index
      %c0_47 = arith.constant 0 : index
      %133 = vector.load %arg5[%c0_43, %c0_44, %c2_45, %c0_46, %c0_47] : memref<1x1x3x2x128xf32, #tpu.memory_space<vmem>>, vector<1x1x1x2x128xf32>
      %134 = vector.shape_cast %133 : vector<1x1x1x2x128xf32> to vector<2x128xf32>
      %135 = vector.shape_cast %132 : vector<2x128xf32> to vector<1x1x1x2x128xf32>
      tpu.vector_store %arg5[%c0_43, %c0_44, %c2_45, %c0_46, %c0_47], %135 {strides = array<i32>} : memref<1x1x3x2x128xf32, #tpu.memory_space<vmem>>, vector<1x1x1x2x128xf32>,
    } else {
    }
    return
  }
  func.func @transform_0(%arg0: i32, %arg1: i32, %arg2: i32) -> (i32, i32) {
    %c1_i32 = arith.constant 1 : i32
    %0 = arith.muli %arg1, %c1_i32 : i32
    %1 = arith.addi %0, %arg2 : i32
    %c0_i32 = arith.constant 0 : i32
    %2 = arith.minsi %1, %c0_i32 : i32
    %c0_i32_0 = arith.constant 0 : i32
    return %arg0, %2 : i32, i32
  }
  func.func @transform_1(%arg0: i32, %arg1: i32, %arg2: i32) -> (i32, i32) {
    %c1_i32 = arith.constant 1 : i32
    %0 = arith.muli %arg1, %c1_i32 : i32
    %1 = arith.addi %0, %arg2 : i32
    %c0_i32 = arith.constant 0 : i32
    %2 = arith.minsi %1, %c0_i32 : i32
    %c0_i32_0 = arith.constant 0 : i32
    return %arg0, %2 : i32, i32
  }
  func.func @transform_2(%arg0: i32, %arg1: i32, %arg2: i32) -> (i32, i32, i32, i32, i32) {
    %c0_i32 = arith.constant 0 : i32
    %c0_i32_0 = arith.constant 0 : i32
    %c0_i32_1 = arith.constant 0 : i32
    %c0_i32_2 = arith.constant 0 : i32
    return %arg0, %arg1, %c0_i32, %c0_i32_0, %c0_i32_1 : i32, i32, i32, i32, i32
  }
}

</mosaic_0001>

<llo_original>
// kernel: tpu_custom_call.1
$region0: #{tpu_custom_call.1}
  #allocation0 [shape = 'u32[]', space=smem, size = 0x4, offset = 0x4, fixed_abs, tag = 'smem constant byte address 0x4 - core index']
  #allocation1 [shape = 'u32[72,128]{1,0:T(1,128)}', space=vmem, size = 0x9000, scoped, tag = 'internal scratch']
  %s0 = inlined_call_operand.hbm [shape: f32[2,1024], index: 0, kind: input, shape index: {}]
  %s1 = inlined_call_operand.hbm [shape: f32[2,1024], index: 1, kind: input, shape index: {}]
  %s2 = inlined_call_operand.hbm [shape: f32[1,1,3,2,128], index: 2, kind: output, shape index: {}]
  %s3 = sld [smem:[#allocation0]]
  $region38: #{tpu_custom_call.1} parent=0
    _
  %s5 = ssub.s32 1, %s3
  %s6 = scalar_select 0, %s5, %s3
  $region1: #{tpu_custom_call.1} parent=0
    #allocation2 [shape = 'u8[8192]{0}', space=vmem, size = 0x2000, scoped, tag = 'input window, operand 0, single buffered']
    #allocation3 [shape = 's32[1]{0}', space=sflag, size = 0x4, scoped, tag = 'scoped memory for tpu_custom_call.1']
    #allocation4 [shape = 's32[1]{0}', space=sflag, size = 0x4, scoped, tag = 'scoped memory for tpu_custom_call.1']
    #allocation5 [shape = 'u8[8192]{0}', space=vmem, size = 0x2000, scoped, tag = 'input window, operand 1, single buffered']
    #allocation6 [shape = 's32[1]{0}', space=sflag, size = 0x4, scoped, tag = 'scoped memory for tpu_custom_call.1']
    #allocation7 [shape = 'u8[3072]{0}', space=vmem, size = 0xc00, scoped, tag = 'output window, operand 0, single buffered']
    %7 = vsyncpa [#allocation3], 0
    %8 = vsyncpa [#allocation6], 0
    %9 = vsyncpa [#allocation4], 0
    // Predicated region
    $region2: #{tpu_custom_call.1} parent=1 // pred_check
      _
    $region3: #{tpu_custom_call.1} parent=1 // pred_check_branch
      %11 = sbr.rel (0) target = $region5
    $region4: #{tpu_custom_call.1} parent=1 // pred_region
      %s12 = sadd.s32 0, 0
      %p13 = scmp.lt.s32.totalorder %s12, 0
      %s14 = scalar_select %p13, %s12, 0
      %s15 = smul.u32 8, %s14
      %17 = vsyncadd [#allocation3], 0
      %s18 = smul.addr %s15, 2
      %s19 = scalar_lea.hbm %s0, %s18
      %s21 = sshll.u32 %s19, 4
      %s22 = int_to_ptr.hbm [resolvable:$true] %s21
      %s23 = sshll.u32 [#allocation2], 4
      %s24 = int_to_ptr.vmem [resolvable:$true] %s23
      %26 = dma.hbm_to_vmem [thread:$0]  %s22, 256, %s24, [#allocation3]
    $region5: #{tpu_custom_call.1} parent=1 // pred_fallthru
      _
    // Predicated region
    $region6: #{tpu_custom_call.1} parent=1 // pred_check
      _
    $region7: #{tpu_custom_call.1} parent=1 // pred_check_branch
      %28 = sbr.rel (0) target = $region9
    $region8: #{tpu_custom_call.1} parent=1 // pred_region
      %s29 = sadd.s32 0, 0
      %p30 = scmp.lt.s32.totalorder %s29, 0
      %s31 = scalar_select %p30, %s29, 0
      %s32 = smul.u32 8, %s31
      %34 = vsyncadd [#allocation6], 0
      %s35 = smul.addr %s32, 2
      %s36 = scalar_lea.hbm %s1, %s35
      %s38 = sshll.u32 %s36, 4
      %s39 = int_to_ptr.hbm [resolvable:$true] %s38
      %s40 = sshll.u32 [#allocation5], 4
      %s41 = int_to_ptr.vmem [resolvable:$true] %s40
      %43 = dma.hbm_to_vmem [thread:$0]  %s39, 256, %s41, [#allocation6]
    $region9: #{tpu_custom_call.1} parent=1 // pred_fallthru
      _
    // Predicated region
    $region10: #{tpu_custom_call.1} parent=1 // pred_check
      _
    $region11: #{tpu_custom_call.1} parent=1 // pred_check_branch
      %45 = sbr.rel (0) target = $region13
    $region12: #{tpu_custom_call.1} parent=1 // pred_region
      %47 = dma.done [#allocation3], 256
    $region13: #{tpu_custom_call.1} parent=1 // pred_fallthru
      _
    // Predicated region
    $region14: #{tpu_custom_call.1} parent=1 // pred_check
      _
    $region15: #{tpu_custom_call.1} parent=1 // pred_check_branch
      %49 = sbr.rel (0) target = $region17
    $region16: #{tpu_custom_call.1} parent=1 // pred_region
      %51 = dma.done [#allocation6], 256
    $region17: #{tpu_custom_call.1} parent=1 // pred_fallthru
      _
    %s52 = sadd.s32 0, 0
    %p53 = scmp.lt.s32.totalorder %s52, 0
    %s54 = scalar_select %p53, %s52, 0
    %s55 = smul.u32 8, %s54
    %s56 = sadd.s32 0, 0
    %p57 = scmp.lt.s32.totalorder %s56, 0
    %s58 = scalar_select %p57, %s56, 0
    %s59 = smul.u32 8, %s58
    %s60 = sadd.s32 0, 0
    %s61 = smul.u32 %s60, 1024
    %p62 = scmp.eq.s32.totalorder 0, 0
    // Predicated region
    $region18: #{tpu_custom_call.1} parent=1 // pred_check
      %p63 = pneg %p62
    $region19: #{tpu_custom_call.1} parent=1 // pred_check_branch
      %65 = sbr.rel (%p63) target = $region21
    $region20: #{tpu_custom_call.1} parent=1 // pred_region
      %66 = vst [vmem:[#allocation7] sm:$0x3] 0.0
      %67 = vst [vmem:[#allocation7 + $0x2] sm:$0x3] 0.0
      %68 = vst [vmem:[#allocation7 + $0x4] sm:$0x3] 0.0
    $region21: #{tpu_custom_call.1} parent=1 // pred_fallthru
      _
    %s69 = sadd.s32 %s61, 1024
    %p70 = scmp.gt.s32.totalorder %s69, 1024
    %p71 = scmp.le.s32.totalorder %s69, 1024
    // Predicated region
    $region22: #{tpu_custom_call.1} parent=1 // pred_check
      %p72 = pneg %p71
    $region23: #{tpu_custom_call.1} parent=1 // pred_check_branch
      %74 = sbr.rel (%p72) target = $region25
    $region24: #{tpu_custom_call.1} parent=1 // pred_region
      %v75 = vld [vmem:[#allocation2] sm:$0xff]
      %v76 = vld [vmem:[#allocation2 + $0x8] sm:$0xff]
      %v77 = vld [vmem:[#allocation5] sm:$0xff]
      %v78 = vld [vmem:[#allocation5 + $0x8] sm:$0xff]
      %v79 = vmul.f32 %v75, %v77
      %v80 = vadd.f32 %v79, 0.0
      %v81 = vadd.f32 %v75, %v77
      %v82 = vadd.f32 %v81, 0.0
      %vm83 = vcmp.gt.f32.partialorder %v75, 0.0
      %v84 = vsel %vm83, 1, 0
      %v85 = vcvt.s32.f32 %v84
      %v86 = vadd.f32 %v85, 0.0
      %v88 = vrot.slane %v75, 2
      %v91 = vrot.slane %v77, 2
      %v93 = vmul.f32 %v88, %v91
      %v94 = vadd.f32 %v80, %v93
      %v95 = vadd.f32 %v88, %v91
      %v96 = vadd.f32 %v82, %v95
      %vm97 = vcmp.gt.f32.partialorder %v88, 0.0
      %v98 = vsel %vm97, 1, 0
      %v99 = vcvt.s32.f32 %v98
      %v100 = vadd.f32 %v86, %v99
      %v101 = vrot.slane %v75, 4
      %v103 = vrot.slane %v77, 4
      %v105 = vmul.f32 %v101, %v103
      %v106 = vadd.f32 %v94, %v105
      %v107 = vadd.f32 %v101, %v103
      %v108 = vadd.f32 %v96, %v107
      %vm109 = vcmp.gt.f32.partialorder %v101, 0.0
      %v110 = vsel %vm109, 1, 0
      %v111 = vcvt.s32.f32 %v110
      %v112 = vadd.f32 %v100, %v111
      %v113 = vrot.slane %v75, 6
      %v115 = vrot.slane %v77, 6
      %v117 = vmul.f32 %v113, %v115
      %v118 = vadd.f32 %v106, %v117
      %v119 = vadd.f32 %v113, %v115
      %v120 = vadd.f32 %v108, %v119
      %vm121 = vcmp.gt.f32.partialorder %v113, 0.0
      %v122 = vsel %vm121, 1, 0
      %v123 = vcvt.s32.f32 %v122
      %v124 = vadd.f32 %v112, %v123
      %v125 = vmul.f32 %v76, %v78
      %v126 = vadd.f32 %v118, %v125
      %v127 = vadd.f32 %v76, %v78
      %v128 = vadd.f32 %v120, %v127
      %vm129 = vcmp.gt.f32.partialorder %v76, 0.0
      %v130 = vsel %vm129, 1, 0
      %v131 = vcvt.s32.f32 %v130
      %v132 = vadd.f32 %v124, %v131
      %v134 = vrot.slane %v76, 2
      %v137 = vrot.slane %v78, 2
      %v139 = vmul.f32 %v134, %v137
      %v140 = vadd.f32 %v126, %v139
      %v141 = vadd.f32 %v134, %v137
      %v142 = vadd.f32 %v128, %v141
      %vm143 = vcmp.gt.f32.partialorder %v134, 0.0
      %v144 = vsel %vm143, 1, 0
      %v145 = vcvt.s32.f32 %v144
      %v146 = vadd.f32 %v132, %v145
      %v147 = vrot.slane %v76, 4
      %v149 = vrot.slane %v78, 4
      %v151 = vmul.f32 %v147, %v149
      %v152 = vadd.f32 %v140, %v151
      %v153 = vadd.f32 %v147, %v149
      %v154 = vadd.f32 %v142, %v153
      %vm155 = vcmp.gt.f32.partialorder %v147, 0.0
      %v156 = vsel %vm155, 1, 0
      %v157 = vcvt.s32.f32 %v156
      %v158 = vadd.f32 %v146, %v157
      %v159 = vrot.slane %v76, 6
      %v161 = vrot.slane %v78, 6
      %v163 = vmul.f32 %v159, %v161
      %v164 = vadd.f32 %v152, %v163
      %v165 = vadd.f32 %v159, %v161
      %v166 = vadd.f32 %v154, %v165
      %vm167 = vcmp.gt.f32.partialorder %v159, 0.0
      %v168 = vsel %vm167, 1, 0
      %v169 = vcvt.s32.f32 %v168
      %v170 = vadd.f32 %v158, %v169
      %v171 = vld [vmem:[#allocation7] sm:$0x3]
      %v172 = vadd.f32 %v171, %v164
      %173 = vst [vmem:[#allocation7] sm:$0x3] %v172
      %s174 = scalar_lea.vmem [#allocation7], 2
      %v175 = vld [vmem:[%s174] sm:$0x3]
      %v176 = vadd.f32 %v175, %v166
      %177 = vst [vmem:[%s174] sm:$0x3] %v176
      %s178 = scalar_lea.vmem [#allocation7], 4
      %v179 = vld [vmem:[%s178] sm:$0x3]
      %v180 = vadd.f32 %v179, %v170
      %181 = vst [vmem:[%s178] sm:$0x3] %v180
    $region25: #{tpu_custom_call.1} parent=1 // pred_fallthru
      _
    // Predicated region
    $region26: #{tpu_custom_call.1} parent=1 // pred_check
      %p182 = pneg %p70
    $region27: #{tpu_custom_call.1} parent=1 // pred_check_branch
      %184 = sbr.rel (%p182) target = $region29
    $region28: #{tpu_custom_call.1} parent=1 // pred_region
      %v185 = vld [vmem:[#allocation2] sm:$0xff]
      %v186 = vld [vmem:[#allocation2 + $0x8] sm:$0xff]
      %v187 = vld [vmem:[#allocation5] sm:$0xff]
      %v188 = vld [vmem:[#allocation5 + $0x8] sm:$0xff]
      %s189 = sadd.s32 %s61, 0
      %v190 = vlaneseq
      %v191 = vand.u32 %v190, 127
      %v192 = vadd.s32 %v191, 128
      %v193 = vadd.s32 %v191, 256
      %v194 = vadd.s32 %v191, 384
      %v195 = vadd.s32 %v191, 512
      %v196 = vadd.s32 %v191, 640
      %v197 = vadd.s32 %v191, 768
      %v198 = vadd.s32 %v191, 896
      %v199 = vstv %s189
      %v200 = vadd.s32 %v199, %v191
      %v201 = vadd.s32 %v199, %v192
      %v202 = vadd.s32 %v199, %v193
      %v203 = vadd.s32 %v199, %v194
      %v204 = vadd.s32 %v199, %v195
      %v205 = vadd.s32 %v199, %v196
      %v206 = vadd.s32 %v199, %v197
      %v207 = vadd.s32 %v199, %v198
      %vm208 = vcmp.lt.s32.totalorder %v200, 1024
      %vm209 = vcmp.lt.s32.totalorder %v201, 1024
      %vm210 = vcmp.lt.s32.totalorder %v202, 1024
      %vm211 = vcmp.lt.s32.totalorder %v203, 1024
      %vm212 = vcmp.lt.s32.totalorder %v204, 1024
      %vm213 = vcmp.lt.s32.totalorder %v205, 1024
      %vm214 = vcmp.lt.s32.totalorder %v206, 1024
      %vm215 = vcmp.lt.s32.totalorder %v207, 1024
      %218 = vst [vmem:[#allocation1] ss:$4 sm:$0xff] %v185
      %s219 = scalar_lea.vmem [#allocation1], 32
      %220 = vst [vmem:[%s219] ss:$4 sm:$0xff] %v186
      %v221 = vld.sshfl [vmem:[#allocation1] sm:$0xff pattern:$0x73625140]
      %v222 = vld.sshfl [vmem:[#allocation1 + $0x8] sm:$0xff pattern:$0x73625140]
      %v223 = vld.sshfl [vmem:[#allocation1 + $0x10] sm:$0xff pattern:$0x73625140]
      %v224 = vld.sshfl [vmem:[#allocation1 + $0x18] sm:$0xff pattern:$0x73625140]
      %v225 = vld.sshfl [vmem:[#allocation1 + $0x20] sm:$0xff pattern:$0x73625140]
      %v226 = vld.sshfl [vmem:[#allocation1 + $0x28] sm:$0xff pattern:$0x73625140]
      %v227 = vld.sshfl [vmem:[#allocation1 + $0x30] sm:$0xff pattern:$0x73625140]
      %v228 = vld.sshfl [vmem:[#allocation1 + $0x38] sm:$0xff pattern:$0x73625140]
      %v237 = vsel %vm208, %v221, 0.0
      %v238 = vsel %vm209, %v222, 0.0
      %v239 = vsel %vm210, %v223, 0.0
      %v240 = vsel %vm211, %v224, 0.0
      %v241 = vsel %vm212, %v225, 0.0
      %v242 = vsel %vm213, %v226, 0.0
      %v243 = vsel %vm214, %v227, 0.0
      %v244 = vsel %vm215, %v228, 0.0
      %247 = vst [vmem:[#allocation1] ss:$4 sm:$0xff] %v187
      %s248 = scalar_lea.vmem [#allocation1], 32
      %249 = vst [vmem:[%s248] ss:$4 sm:$0xff] %v188
      %v250 = vld.sshfl [vmem:[#allocation1] sm:$0xff pattern:$0x73625140]
      %v251 = vld.sshfl [vmem:[#allocation1 + $0x8] sm:$0xff pattern:$0x73625140]
      %v252 = vld.sshfl [vmem:[#allocation1 + $0x10] sm:$0xff pattern:$0x73625140]
      %v253 = vld.sshfl [vmem:[#allocation1 + $0x18] sm:$0xff pattern:$0x73625140]
      %v254 = vld.sshfl [vmem:[#allocation1 + $0x20] sm:$0xff pattern:$0x73625140]
      %v255 = vld.sshfl [vmem:[#allocation1 + $0x28] sm:$0xff pattern:$0x73625140]
      %v256 = vld.sshfl [vmem:[#allocation1 + $0x30] sm:$0xff pattern:$0x73625140]
      %v257 = vld.sshfl [vmem:[#allocation1 + $0x38] sm:$0xff pattern:$0x73625140]
      %v266 = vsel %vm208, %v250, 0.0
      %v267 = vsel %vm209, %v251, 0.0
      %v268 = vsel %vm210, %v252, 0.0
      %v269 = vsel %vm211, %v253, 0.0
      %v270 = vsel %vm212, %v254, 0.0
      %v271 = vsel %vm213, %v255, 0.0
      %v272 = vsel %vm214, %v256, 0.0
      %v273 = vsel %vm215, %v257, 0.0
      %v274 = vmul.f32 %v237, %v266
      %v275 = vadd.f32 %v274, 0.0
      %v276 = vadd.f32 %v237, %v266
      %v277 = vadd.f32 %v276, 0.0
      %vm278 = vcmp.gt.f32.partialorder %v237, 0.0
      %v279 = vsel %vm278, 1, 0
      %v280 = vcvt.s32.f32 %v279
      %v281 = vadd.f32 %v280, 0.0
      %v282 = vmul.f32 %v238, %v267
      %v283 = vadd.f32 %v275, %v282
      %v284 = vadd.f32 %v238, %v267
      %v285 = vadd.f32 %v277, %v284
      %vm286 = vcmp.gt.f32.partialorder %v238, 0.0
      %v287 = vsel %vm286, 1, 0
      %v288 = vcvt.s32.f32 %v287
      %v289 = vadd.f32 %v281, %v288
      %v290 = vmul.f32 %v239, %v268
      %v291 = vadd.f32 %v283, %v290
      %v292 = vadd.f32 %v239, %v268
      %v293 = vadd.f32 %v285, %v292
      %vm294 = vcmp.gt.f32.partialorder %v239, 0.0
      %v295 = vsel %vm294, 1, 0
      %v296 = vcvt.s32.f32 %v295
      %v297 = vadd.f32 %v289, %v296
      %v298 = vmul.f32 %v240, %v269
      %v299 = vadd.f32 %v291, %v298
      %v300 = vadd.f32 %v240, %v269
      %v301 = vadd.f32 %v293, %v300
      %vm302 = vcmp.gt.f32.partialorder %v240, 0.0
      %v303 = vsel %vm302, 1, 0
      %v304 = vcvt.s32.f32 %v303
      %v305 = vadd.f32 %v297, %v304
      %v306 = vmul.f32 %v241, %v270
      %v307 = vadd.f32 %v299, %v306
      %v308 = vadd.f32 %v241, %v270
      %v309 = vadd.f32 %v301, %v308
      %vm310 = vcmp.gt.f32.partialorder %v241, 0.0
      %v311 = vsel %vm310, 1, 0
      %v312 = vcvt.s32.f32 %v311
      %v313 = vadd.f32 %v305, %v312
      %v314 = vmul.f32 %v242, %v271
      %v315 = vadd.f32 %v307, %v314
      %v316 = vadd.f32 %v242, %v271
      %v317 = vadd.f32 %v309, %v316
      %vm318 = vcmp.gt.f32.partialorder %v242, 0.0
      %v319 = vsel %vm318, 1, 0
      %v320 = vcvt.s32.f32 %v319
      %v321 = vadd.f32 %v313, %v320
      %v322 = vmul.f32 %v243, %v272
      %v323 = vadd.f32 %v315, %v322
      %v324 = vadd.f32 %v243, %v272
      %v325 = vadd.f32 %v317, %v324
      %vm326 = vcmp.gt.f32.partialorder %v243, 0.0
      %v327 = vsel %vm326, 1, 0
      %v328 = vcvt.s32.f32 %v327
      %v329 = vadd.f32 %v321, %v328
      %v330 = vmul.f32 %v244, %v273
      %v331 = vadd.f32 %v323, %v330
      %v332 = vadd.f32 %v244, %v273
      %v333 = vadd.f32 %v325, %v332
      %vm334 = vcmp.gt.f32.partialorder %v244, 0.0
      %v335 = vsel %vm334, 1, 0
      %v336 = vcvt.s32.f32 %v335
      %v337 = vadd.f32 %v329, %v336
      %v338 = vld [vmem:[#allocation7] sm:$0x3]
      %v339 = vadd.f32 %v338, %v331
      %340 = vst [vmem:[#allocation7] sm:$0x3] %v339
      %s341 = scalar_lea.vmem [#allocation7], 2
      %v342 = vld [vmem:[%s341] sm:$0x3]
      %v343 = vadd.f32 %v342, %v333
      %344 = vst [vmem:[%s341] sm:$0x3] %v343
      %s345 = scalar_lea.vmem [#allocation7], 4
      %v346 = vld [vmem:[%s345] sm:$0x3]
      %v347 = vadd.f32 %v346, %v337
      %348 = vst [vmem:[%s345] sm:$0x3] %v347
    $region29: #{tpu_custom_call.1} parent=1 // pred_fallthru
      _
    // Predicated region
    $region30: #{tpu_custom_call.1} parent=1 // pred_check
      _
    $region31: #{tpu_custom_call.1} parent=1 // pred_check_branch
      %350 = sbr.rel (0) target = $region33
    $region32: #{tpu_custom_call.1} parent=1 // pred_region
      %352 = vsyncadd [#allocation4], 0
      %s353 = sshll.u32 [#allocation7], 4
      %s354 = int_to_ptr.vmem [resolvable:$true] %s353
      %s355 = sshll.u32 %s2, 4
      %s356 = int_to_ptr.hbm [resolvable:$true] %s355
      %361 = dma.vmem_to_hbm [thread:$0]  %s354, 96, %s356, [#allocation4], 32, 32, 2
    $region33: #{tpu_custom_call.1} parent=1 // pred_fallthru
      _
    // Predicated region
    $region34: #{tpu_custom_call.1} parent=1 // pred_check
      _
    $region35: #{tpu_custom_call.1} parent=1 // pred_check_branch
      %363 = sbr.rel (0) target = $region37
    $region36: #{tpu_custom_call.1} parent=1 // pred_region
      %365 = dma.done [#allocation4], 96
    $region37: #{tpu_custom_call.1} parent=1 // pred_fallthru
      _
    %366 = vsyncpa [#allocation3], 1
    %367 = vsyncpa [#allocation6], 1
    %368 = vsyncpa [#allocation4], 1

</llo_original>
